<compile_context>
chip_gen: v6e
topology: v6e:2x2x1
jax: 0.10.0
libtpu: 0.0.40
codegen_flags: <defaults>
</compile_context>

<pallas_src>
import functools
import math

import jax
import jax.numpy as jnp
from jax.experimental import pallas as pl
from jax.experimental.pallas import tpu as pltpu


def _round_up(x, m):
    return ((x + m - 1) // m) * m


def _erfinv_poly_f32(v, approx_tail=False):
    """Return p with erfinv(v) == p * v for v strictly inside (-1, 1).

    Giles' single-precision polynomial.  log/sqrt land in the EUP slot (free
    next to the VALU-bound FMA chain).  approx_tail=True drops the w>=5 branch
    (~0.3% of draws), clipping |z| at ~2.9 sigma -- opt-in only.
    """
    w = -jnp.log(jnp.float32(1.0) - v * v)       # 1 - v*v: one VALU op fewer than (1-v)(1+v)
    w_c = w - jnp.float32(2.5)
    p_c = jnp.float32(2.81022636e-08)
    for c in (3.43273939e-07, -3.5233877e-06, -4.39150654e-06, 0.00021858087,
              -0.00125372503, -0.00417768164, 0.246640727, 1.50140941):
        p_c = jnp.float32(c) + p_c * w_c
    if approx_tail:
        return p_c
    w_t = jnp.sqrt(w) - jnp.float32(3.0)
    p_t = jnp.float32(-0.000200214257)
    for c in (0.000100950558, 0.00134934322, -0.00367342844, 0.00573950773,
              -0.0076224613, 0.00943887047, 1.00167406, 2.83297682):
        p_t = jnp.float32(c) + p_t * w_t
    return jnp.where(w < jnp.float32(5.0), p_c, p_t)


def _langevin_prng_kernel(seed_ref, energy_ref, out_ref, *, drift, c_noise, approx_tail):
    """TPU path: refined = (energy - drift) + c_noise * (erfinv_poly(v) * v).

    Noise comes from the hardware PRNG, so the kernel reads one array and
    writes one array (minimum HBM traffic).  c_noise = noise_scale *
    sqrt(num_steps) * sqrt(2) is pre-folded into a single constant.
    """
    x = energy_ref[...].astype(jnp.float32)

    # Independent stream per grid block (safe under "parallel" semantics).
    pltpu.prng_seed(seed_ref[0], pl.program_id(0))
    bits = pltpu.prng_random_bits(x.shape)
    if bits.dtype != jnp.dtype("uint32"):
        bits = pltpu.bitcast(bits, jnp.uint32)

    # Exponent-bit trick: 23 random mantissa bits OR'd with the exponent of 1.0
    # give a uniform in [1, 2); forcing the lowest mantissa bit keeps u away from
    # the endpoints so v below is never exactly +-1 (log(1 - v*v) stays finite).
    mant = jnp.right_shift(bits, jnp.uint32(9))
    fbits = jnp.bitwise_or(mant, jnp.uint32(0x3F800001))
    u = pltpu.bitcast(fbits, jnp.float32)                    # uniform in (1, 2)
    v = u * jnp.float32(2.0) - jnp.float32(3.0)              # uniform in (-1, 1)

    p = _erfinv_poly_f32(v, approx_tail=approx_tail)         # z = sqrt(2) * p * v
    out_ref[...] = (x - jnp.float32(drift)
                    + jnp.float32(c_noise) * (p * v)).astype(out_ref.dtype)


def _langevin_noise_kernel(energy_ref, noise_ref, out_ref, *, drift, sigma):
    """Portable path (CPU / interpret): Gaussian noise precomputed by jax.random."""
    x = energy_ref[...].astype(jnp.float32)
    z = noise_ref[...].astype(jnp.float32)
    out_ref[...] = (x - jnp.float32(drift) + jnp.float32(sigma) * z).astype(out_ref.dtype)


def _lane_dense_view(total, max_lane_width):
    """Pick lane width W (multiple of 128, <= max_lane_width) dividing `total`
    exactly when possible, so the (rows, W) view needs no pad and no output slice."""
    if total % 128 == 0:
        chunks = total // 128
        d = 1
        for cand in range(min(max_lane_width // 128, 8), 0, -1):
            if chunks % cand == 0:
                d = cand
                break
        return 128 * d, 0
    # Rare fallback: element count not a multiple of 128 -> pad one 128-lane row.
    return 128, _round_up(total, 128) - total


@functools.partial(jax.jit, static_argnames=(
    "step_size", "noise_scale", "num_steps", "training",
    "tile_rows", "max_lane_width", "approx_tail"))
def langevin_refined_energy(energy, seed=0, *, step_size=0.05, noise_scale=0.1,
                            num_steps=32, training=True,
                            tile_rows=512, max_lane_width=1024,
                            approx_tail=False):
    """Pallas implementation of LangevinRefinedEnergyModule.forward.

    energy: any-shape float array.  Returns refined_energy with the same shape
    and dtype.  Noise matches torch.randn_like distributionally (not bitwise);
    advance `seed` across calls to draw fresh noise each forward.
    """
    assert step_size > 0 and noise_scale > 0 and num_steps >= 0

    # PyTorch module: eval mode or num_steps == 0 returns the input unchanged.
    if num_steps == 0 or not training:
        return energy

    orig_shape = energy.shape
    orig_dtype = energy.dtype
    total = int(math.prod(orig_shape)) if orig_shape else 1

    # gradients = d(energy.sum())/d(energy) == 1 exactly -> constant drift.
    drift = float(step_size) * float(num_steps)
    sigma = float(noise_scale) * math.sqrt(float(num_steps))

    # Lane-dense (rows, W) view with no pad/slice whenever total % 128 == 0.
    W, pad = _lane_dense_view(total, max_lane_width)
    flat = jnp.ravel(energy)
    if pad:
        flat = jnp.pad(flat, (0, pad))          # only when total is not a multiple of 128
    rows = (total + pad) // W
    x2 = flat.reshape(rows, W)

    # Row tile: multiple of 8 (or the full row count when rows < 8), capped at
    # ceil(rows/2) so the grid has >= 2 steps whenever possible (v7x megacore).
    # Ragged last blocks are masked by Pallas, so rows need not divide evenly.
    if rows <= 8:
        tr = rows
    else:
        tr = max(8, min(_round_up(int(tile_rows), 8),
                        _round_up((rows + 1) // 2, 8)))
    grid = pl.cdiv(rows, tr)

    on_tpu = jax.default_backend() == "tpu"

    if on_tpu:
        # Fast path: hardware PRNG in-kernel -> one HBM read + one HBM write.
        c_noise = sigma * math.sqrt(2.0)                       # sigma*sqrt(2) folded once
        kernel = functools.partial(_langevin_prng_kernel, drift=drift,
                                   c_noise=c_noise, approx_tail=approx_tail)
        seed_arr = jnp.reshape(jnp.asarray(seed, jnp.int32), (1,))
        out2 = pl.pallas_call(
            kernel,
            out_shape=jax.ShapeDtypeStruct((rows, W), orig_dtype),
            grid_spec=pltpu.PrefetchScalarGridSpec(
                num_scalar_prefetch=1,                         # seed lives in SMEM
                grid=(grid,),
                in_specs=[pl.BlockSpec((tr, W), lambda i, s: (i, 0))],
                out_specs=pl.BlockSpec((tr, W), lambda i, s: (i, 0)),
            ),
            compiler_params=pltpu.CompilerParams(
                dimension_semantics=("parallel",)),
        )(seed_arr, x2)
    else:
        # Portable path: pltpu.prng_* has no lowering off-TPU (e.g. CPU interpret),
        # so draw the Gaussian noise with jax.random and stream it into the kernel.
        key = jax.random.PRNGKey(jnp.asarray(seed, jnp.int32))
        z2 = jax.random.normal(key, (rows, W), dtype=jnp.float32)
        kernel = functools.partial(_langevin_noise_kernel, drift=drift, sigma=sigma)
        out2 = pl.pallas_call(
            kernel,
            out_shape=jax.ShapeDtypeStruct((rows, W), orig_dtype),
            grid=(grid,),
            in_specs=[pl.BlockSpec((tr, W), lambda i: (i, 0)),
                      pl.BlockSpec((tr, W), lambda i: (i, 0))],
            out_specs=pl.BlockSpec((tr, W), lambda i: (i, 0)),
            compiler_params=pltpu.CompilerParams(
                dimension_semantics=("parallel",)),
        )(x2, z2)

    if pad:
        return out2.reshape(-1)[:total].reshape(orig_shape)
    return out2.reshape(orig_shape)


if __name__ == "__main__":
    key = jax.random.PRNGKey(0)
    k1, k2, k3 = jax.random.split(key, 3)

    # Small shape implied by the forward: energy is an arbitrary float tensor.
    B, N, K = 2, 8, 32
    energy = jax.random.normal(k1, (B, N, K), dtype=jnp.float32)

    refined = jax.block_until_ready(langevin_refined_energy(energy, seed=42))
    assert refined.shape == energy.shape
    assert refined.dtype == energy.dtype
    assert bool(jnp.all(jnp.isfinite(refined)))
    # delta = -step*num_steps + noise_scale*sqrt(num_steps)*z ; drift = 1.6, |z| small
    delta = refined - energy
    assert bool(jnp.max(jnp.abs(delta + 1.6)) < 5.0)

    # eval mode / num_steps == 0: module returns the input unchanged.
    assert bool(jnp.all(langevin_refined_energy(energy, seed=42, training=False) == energy))
    assert bool(jnp.all(langevin_refined_energy(energy, seed=42, num_steps=0) == energy))

    # Medium tensor: multi-block grid with a ragged (masked) last row-block,
    # plus a loose statistical check on the injected noise.
    energy_m = jax.random.normal(k2, (4, 64, 96), dtype=jnp.float32)   # 24576 elems
    refined_m = jax.block_until_ready(langevin_refined_energy(energy_m, seed=3))
    d = (refined_m - energy_m).astype(jnp.float32)
    mean_d = float(jnp.mean(d))
    std_d = float(jnp.std(d))
    assert abs(mean_d + 1.6) < 0.05, mean_d        # drift = 0.05 * 32 = 1.6
    assert 0.45 < std_d < 0.70, std_d              # sigma = 0.1 * sqrt(32) ~= 0.566

    # Element count not a multiple of 128 exercises the (rare) padded fallback.
    energy_o = jax.random.normal(k3, (3, 7, 5), dtype=jnp.float32)
    refined_o = jax.block_until_ready(langevin_refined_energy(energy_o, seed=11))
    assert refined_o.shape == energy_o.shape
    assert bool(jnp.all(jnp.isfinite(refined_o)))

    # Native-dtype path: bf16 in / bf16 out, arithmetic in f32 inside the kernel.
    energy_bf16 = energy.astype(jnp.bfloat16)
    refined_bf16 = jax.block_until_ready(langevin_refined_energy(energy_bf16, seed=7))
    assert refined_bf16.shape == energy_bf16.shape
    assert refined_bf16.dtype == jnp.bfloat16
    assert bool(jnp.all(jnp.isfinite(refined_bf16.astype(jnp.float32))))

    print("KERNEL_OK")
</pallas_src>

<mosaic_0001>
module attributes {stable_mosaic.version = 11 : i64} {
  func.func @_langevin_noise_kernel(%arg0: i32, %arg1: memref<1x512xf32, #tpu.memory_space<vmem>>, %arg2: memref<1x512xf32, #tpu.memory_space<vmem>>, %arg3: memref<1x512xf32, #tpu.memory_space<vmem>>) attributes {dimension_semantics = [#tpu.dimension_semantics<parallel>], iteration_bounds = array<i64: 1>, scalar_prefetch = 0 : i64, scratch_operands = 0 : i64, tpu.core_type = #tpu.core_type<tc>, window_params = [{transform_indices = @transform_0, window_bounds = array<i64: 1, 512>}, {transform_indices = @transform_1, window_bounds = array<i64: 1, 512>}, {transform_indices = @transform_2, window_bounds = array<i64: 1, 512>}]} {
    %c0 = arith.constant 0 : index
    %c0_0 = arith.constant 0 : index
    %0 = vector.load %arg1[%c0, %c0_0] : memref<1x512xf32, #tpu.memory_space<vmem>>, vector<1x512xf32>
    %c0_1 = arith.constant 0 : index
    %c0_2 = arith.constant 0 : index
    %1 = vector.load %arg2[%c0_1, %c0_2] : memref<1x512xf32, #tpu.memory_space<vmem>>, vector<1x512xf32>
    %cst = arith.constant 1.600000e+00 : f32
    %2 = vector.broadcast %cst : f32 to vector<1x512xf32>
    %3 = arith.subf %0, %2 : vector<1x512xf32>
    %cst_3 = arith.constant 0.565685451 : f32
    %4 = vector.broadcast %cst_3 : f32 to vector<1x512xf32>
    %5 = arith.mulf %4, %1 : vector<1x512xf32>
    %6 = arith.addf %3, %5 : vector<1x512xf32>
    %c0_4 = arith.constant 0 : index
    %c0_5 = arith.constant 0 : index
    %7 = vector.load %arg3[%c0_4, %c0_5] : memref<1x512xf32, #tpu.memory_space<vmem>>, vector<1x512xf32>
    tpu.vector_store %arg3[%c0_4, %c0_5], %6 {strides = array<i32>} : memref<1x512xf32, #tpu.memory_space<vmem>>, vector<1x512xf32>,
    return
  }
  func.func @transform_0(%arg0: i32) -> (i32, i32) {
    %c0_i32 = arith.constant 0 : i32
    %c0_i32_0 = arith.constant 0 : i32
    return %arg0, %c0_i32 : i32, i32
  }
  func.func @transform_1(%arg0: i32) -> (i32, i32) {
    %c0_i32 = arith.constant 0 : i32
    %c0_i32_0 = arith.constant 0 : i32
    return %arg0, %c0_i32 : i32, i32
  }
  func.func @transform_2(%arg0: i32) -> (i32, i32) {
    %c0_i32 = arith.constant 0 : i32
    %c0_i32_0 = arith.constant 0 : i32
    return %arg0, %c0_i32 : i32, i32
  }
}

</mosaic_0001>

<llo_original>
// kernel: langevin_refined_energy.1
$region0: #{langevin_refined_energy.1}
  #allocation0 [shape = 'u32[]', space=smem, size = 0x4, offset = 0x4, fixed_abs, tag = 'smem constant byte address 0x4 - core index']
  #allocation1 [shape = 'u32[144,128]{1,0:T(1,128)}', space=vmem, size = 0x12000, scoped, tag = 'internal scratch']
  %s0 = inlined_call_operand.vmem [shape: f32[1,512], index: 0, kind: input, shape index: {}]
  %s1 = inlined_call_operand.vmem [shape: f32[1,512], index: 1, kind: input, shape index: {}]
  %s2 = inlined_call_operand.vmem [shape: f32[1,512], index: 2, kind: output, shape index: {}]
  %s3 = sld [smem:[#allocation0]]
  $region18: #{langevin_refined_energy.1} parent=0
    _
  %s5 = ssub.s32 1, %s3
  %s6 = scalar_select 0, %s5, %s3
  // Predicated region
  $region2: #{langevin_refined_energy.1} parent=0 // pred_check
    _
  $region3: #{langevin_refined_energy.1} parent=0 // pred_check_branch
    %8 = sbr.rel (0) target = $region5
  $region4: #{langevin_refined_energy.1} parent=0 // pred_region
    _
  $region5: #{langevin_refined_energy.1} parent=0 // pred_fallthru
    _
  // Predicated region
  $region6: #{langevin_refined_energy.1} parent=0 // pred_check
    _
  $region7: #{langevin_refined_energy.1} parent=0 // pred_check_branch
    %10 = sbr.rel (0) target = $region9
  $region8: #{langevin_refined_energy.1} parent=0 // pred_region
    _
  $region9: #{langevin_refined_energy.1} parent=0 // pred_fallthru
    _
  %v11 = vld [vmem:[%s0] sm:$0xf]
  %v12 = vld [vmem:[%s1] sm:$0xf]
  %v13 = vsub.f32 %v11, 1.6
  %v14 = vmul.f32 %v12, 0.56568545
  %v15 = vadd.f32 %v13, %v14
  %v16 = vlaneseq
  %vm17 = vcmp.ge.s32.totalorder %v16, 0
  %vm18 = vcmp.lt.s32.totalorder %v16, 512
  %vm19 = vmand %vm17, %vm18
  %20 = vst.msk [vmem:[%s2] sm:$0xf] %vm19, %v15
  // Predicated region
  $region10: #{langevin_refined_energy.1} parent=0 // pred_check
    _
  $region11: #{langevin_refined_energy.1} parent=0 // pred_check_branch
    %22 = sbr.rel (0) target = $region13
  $region12: #{langevin_refined_energy.1} parent=0 // pred_region
    _
  $region13: #{langevin_refined_energy.1} parent=0 // pred_fallthru
    _
  // Predicated region
  $region14: #{langevin_refined_energy.1} parent=0 // pred_check
    _
  $region15: #{langevin_refined_energy.1} parent=0 // pred_check_branch
    %24 = sbr.rel (0) target = $region17
  $region16: #{langevin_refined_energy.1} parent=0 // pred_region
    _
  $region17: #{langevin_refined_energy.1} parent=0 // pred_fallthru
    _

</llo_original>
